<compile_context>
chip_gen: v7x
topology: tpu7x:2x2x1
jax: 0.10.0
libtpu: 0.0.40
codegen_flags: <defaults>
</compile_context>

<pallas_src>
import functools

import jax
import jax.numpy as jnp
from jax.experimental import pallas as pl
from jax.experimental.pallas import tpu as pltpu

_LANE = 128
_SUBLANE = 8


def _round_up(x, m):
    return ((x + m - 1) // m) * m


def _sum_parts(parts):
    parts = [p for p in parts if p is not None]
    return functools.reduce(lambda a, b: a + b, parts)


def _make_dice_kernel(rows_valid, tr, num_k):
    """Build the kernel for: rows_valid real feature-rows per sample,
    tr rows per tile (multiple of 8), num_k row tiles (reduction axis)."""
    rows_total = tr * num_k
    need_mask = rows_valid != rows_total
    last_valid = rows_valid - (num_k - 1) * tr     # valid rows in the final tile
    nchunks = tr // _SUBLANE
    nacc = min(8, nchunks)                         # independent partial sums

    def accumulate(m1_ref, m2_ref, inter_acc, sum_acc, valid_rows):
        inter_parts = [None] * nacc
        sum_parts = [None] * nacc
        for c in range(nchunks):
            lo = c * _SUBLANE
            if lo >= valid_rows:
                break                              # rest of tile is padding: skip loads
            a = m1_ref[:, lo:lo + _SUBLANE, :].astype(jnp.float32)   # (tn, 8, 128)
            b = m2_ref[:, lo:lo + _SUBLANE, :].astype(jnp.float32)
            if lo + _SUBLANE > valid_rows:
                # Straddling chunk: zero the padding rows (exact for all sums).
                rows = jax.lax.broadcasted_iota(jnp.int32, a.shape, 1)
                keep = rows < (valid_rows - lo)
                a = jnp.where(keep, a, 0.0)
                b = jnp.where(keep, b, 0.0)
            p = a * b
            s = a + b
            slot = c % nacc
            inter_parts[slot] = p if inter_parts[slot] is None else inter_parts[slot] + p
            sum_parts[slot] = s if sum_parts[slot] is None else sum_parts[slot] + s
        # Single vreg-sized accumulator update per stream (fused s1+s2 stream).
        inter_acc[...] += _sum_parts(inter_parts)
        sum_acc[...] += _sum_parts(sum_parts)

    def kernel(m1_ref, m2_ref, score_ref, inter_acc, sum_acc):
        # m1_ref / m2_ref: (tn, tr, 128) blocks; score_ref: (tn, 1, 128) output;
        # inter_acc / sum_acc: (tn, 8, 128) f32 VMEM accumulators resident
        # across the row-tile (reduction) grid axis.
        k = pl.program_id(1)

        @pl.when(k == 0)
        def _init():
            inter_acc[...] = jnp.zeros_like(inter_acc)
            sum_acc[...] = jnp.zeros_like(sum_acc)

        if not need_mask:
            accumulate(m1_ref, m2_ref, inter_acc, sum_acc, tr)
        elif num_k == 1:
            accumulate(m1_ref, m2_ref, inter_acc, sum_acc, last_valid)
        else:
            @pl.when(k < num_k - 1)
            def _steady():
                accumulate(m1_ref, m2_ref, inter_acc, sum_acc, tr)

            @pl.when(k == num_k - 1)
            def _tail():
                accumulate(m1_ref, m2_ref, inter_acc, sum_acc, last_valid)

        @pl.when(k == num_k - 1)
        def _finalize():
            smooth = jnp.float32(1.0)
            inter = jnp.sum(jnp.sum(inter_acc[...], axis=1, keepdims=True),
                            axis=2, keepdims=True)                    # (tn, 1, 1)
            s12 = jnp.sum(jnp.sum(sum_acc[...], axis=1, keepdims=True),
                          axis=2, keepdims=True)                      # (tn, 1, 1)
            score = 2.0 * (inter + smooth) / (s12 + smooth)
            score_ref[...] = jnp.broadcast_to(score, score_ref.shape)

    return kernel


def dice_loss(inputs, targets, *, tile_rows=1024, input_dtype=None, target_dtype=None):
    """Pallas-backed DiceLoss.forward for (N, ...)-shaped inputs/targets.

    input_dtype / target_dtype: optional narrower storage dtypes (e.g.
    jnp.bfloat16) to cut HBM traffic; 0/1 target masks stay exact. Accumulation
    inside the kernel is always float32. Defaults preserve exact semantics.
    """
    n = targets.shape[0]
    f = 1
    for d in inputs.shape[1:]:
        f *= d

    m1 = inputs.reshape(n, f)
    m2 = targets.reshape(n, f)
    if input_dtype is not None:
        m1 = m1.astype(input_dtype)
    if target_dtype is not None:
        m2 = m2.astype(target_dtype)

    # Lane-dense layout: rows of 128 features. Only pad (a full HBM copy) when
    # the feature count is not lane-aligned; row remainders are masked in-kernel.
    r = pl.cdiv(f, _LANE)
    if f != r * _LANE:
        pad = r * _LANE - f                     # zero pad is exact for all sums
        m1 = jnp.pad(m1, ((0, 0), (0, pad)))
        m2 = jnp.pad(m2, ((0, 0), (0, pad)))
    m1 = m1.reshape(n, r, _LANE)
    m2 = m2.reshape(n, r, _LANE)

    # Adaptive row tiling: minimal slack, tile rows a multiple of 8 sublanes.
    tile_rows = max(_SUBLANE, _round_up(tile_rows, _SUBLANE))
    r8 = _round_up(r, _SUBLANE)
    num_k = pl.cdiv(r8, tile_rows)
    tr = _round_up(pl.cdiv(r8, num_k), _SUBLANE)

    # Sample blocking for small-F workloads so DMA blocks stay big and the
    # per-grid-step overhead amortizes; large-F workloads use tn = 1.
    tn = max(1, min(n, tile_rows // tr)) if num_k == 1 else 1
    n_tiles = pl.cdiv(n, tn)

    kernel = _make_dice_kernel(r, tr, num_k)

    scores = pl.pallas_call(
        kernel,
        out_shape=jax.ShapeDtypeStruct((n_tiles * tn, 1, _LANE), jnp.float32),
        grid_spec=pltpu.PrefetchScalarGridSpec(
            num_scalar_prefetch=0,
            grid=(n_tiles, num_k),
            in_specs=[
                pl.BlockSpec((tn, tr, _LANE), lambda i, k: (i, k, 0)),
                pl.BlockSpec((tn, tr, _LANE), lambda i, k: (i, k, 0)),
            ],
            out_specs=pl.BlockSpec((tn, 1, _LANE), lambda i, k: (i, 0, 0)),
            scratch_shapes=[
                pltpu.VMEM((tn, _SUBLANE, _LANE), jnp.float32),
                pltpu.VMEM((tn, _SUBLANE, _LANE), jnp.float32),
            ],
        ),
        compiler_params=pltpu.CompilerParams(
            dimension_semantics=("parallel", "arbitrary"),
            vmem_limit_bytes=32 * 1024 * 1024,
        ),
    )(m1, m2)

    # Trivial final combine (N scalars) outside the kernel; drop padded sample
    # rows produced by a partial last sample block.
    return 1.0 - jnp.sum(scores[:n, 0, 0]) / jnp.float32(n)


def dice_loss_ref(inputs, targets):
    """Pure-JAX reference matching the PyTorch module semantics."""
    n = targets.shape[0]
    smooth = 1.0
    m1 = inputs.reshape(n, -1).astype(jnp.float32)
    m2 = targets.reshape(n, -1).astype(jnp.float32)
    inter = jnp.sum(m1 * m2, axis=1)
    score = 2.0 * (inter + smooth) / (jnp.sum(m1, axis=1) + jnp.sum(m2, axis=1) + smooth)
    return 1.0 - jnp.sum(score) / n


if __name__ == "__main__":
    key = jax.random.PRNGKey(0)
    ks = jax.random.split(key, 12)

    def make_case(k_in, k_tgt, shape):
        x = jax.nn.sigmoid(jax.random.normal(k_in, shape, dtype=jnp.float32))
        t = (jax.random.uniform(k_tgt, shape) > 0.5).astype(jnp.float32)
        return x, t

    # Case 1: lane-aligned small images -> sample-blocked path (num_k == 1).
    x1, t1 = make_case(ks[0], ks[1], (2, 4, 16, 16))
    l1 = dice_loss(x1, t1)
    jax.block_until_ready(l1)
    assert jnp.allclose(l1, dice_loss_ref(x1, t1), rtol=1e-5, atol=1e-5), l1

    # Case 1b: bf16 target narrowing (exact for 0/1 masks).
    l1b = dice_loss(x1, t1, target_dtype=jnp.bfloat16)
    jax.block_until_ready(l1b)
    assert jnp.allclose(l1b, dice_loss_ref(x1, t1), rtol=1e-5, atol=1e-5), l1b

    # Case 2: small tile_rows forces a multi-tile reduction (init/acc/finalize).
    x2, t2 = make_case(ks[2], ks[3], (2, 4, 32, 32))
    l2 = dice_loss(x2, t2, tile_rows=8)
    jax.block_until_ready(l2)
    assert jnp.allclose(l2, dice_loss_ref(x2, t2), rtol=1e-5, atol=1e-5), l2

    # Case 3: non-lane-aligned feature count (wrapper lane-padding path).
    x3, t3 = make_case(ks[4], ks[5], (2, 3, 18, 18))
    l3 = dice_loss(x3, t3)
    jax.block_until_ready(l3)
    assert jnp.allclose(l3, dice_loss_ref(x3, t3), rtol=1e-5, atol=1e-5), l3

    # Case 4: row count not a multiple of 8 -> in-kernel row masking (num_k == 1).
    x4, t4 = make_case(ks[6], ks[7], (2, 3, 20, 20))
    l4 = dice_loss(x4, t4)
    jax.block_until_ready(l4)
    assert jnp.allclose(l4, dice_loss_ref(x4, t4), rtol=1e-5, atol=1e-5), l4

    # Case 5: masked tail tile with a multi-tile reduction (num_k > 1).
    x5, t5 = make_case(ks[8], ks[9], (2, 6, 16, 16))
    l5 = dice_loss(x5, t5, tile_rows=8)
    jax.block_until_ready(l5)
    assert jnp.allclose(l5, dice_loss_ref(x5, t5), rtol=1e-5, atol=1e-5), l5

    # Case 6: batch not divisible by the sample block (partial sample tile).
    x6, t6 = make_case(ks[10], ks[11], (3, 4, 16, 16))
    l6 = dice_loss(x6, t6, tile_rows=16)
    jax.block_until_ready(l6)
    assert jnp.allclose(l6, dice_loss_ref(x6, t6), rtol=1e-5, atol=1e-5), l6

    print("KERNEL_OK")
</pallas_src>

<mosaic_0001>
module attributes {stable_mosaic.version = 11 : i64} {
  func.func @kernel(%arg0: i32, %arg1: i32, %arg2: memref<2x8x128xf32, #tpu.memory_space<vmem>>, %arg3: memref<2x8x128xf32, #tpu.memory_space<vmem>>, %arg4: memref<2x1x128xf32, #tpu.memory_space<vmem>>, %arg5: memref<2x8x128xf32, #tpu.memory_space<vmem>>, %arg6: memref<2x8x128xf32, #tpu.memory_space<vmem>>) attributes {dimension_semantics = [#tpu.dimension_semantics<parallel>, #tpu.dimension_semantics<arbitrary>], iteration_bounds = array<i64: 1, 1>, scalar_prefetch = 0 : i64, scratch_operands = 2 : i64, tpu.core_type = #tpu.core_type<tc>, window_params = [{transform_indices = @transform_0, window_bounds = array<i64: 2, 8, 128>}, {transform_indices = @transform_1, window_bounds = array<i64: 2, 8, 128>}, {transform_indices = @transform_2, window_bounds = array<i64: 2, 1, 128>}]} {
    %c0_i32 = arith.constant 0 : i32
    %0 = arith.cmpi eq, %arg1, %c0_i32 : i32
    %1 = arith.extui %0 : i1 to i32
    %c0_i32_0 = arith.constant 0 : i32
    %2 = arith.cmpi ne, %1, %c0_i32_0 : i32
    scf.if %2 {
      %cst = arith.constant 0.000000e+00 : f32
      %16 = vector.broadcast %cst : f32 to vector<2x8x128xf32>
      %c0_20 = arith.constant 0 : index
      %c0_21 = arith.constant 0 : index
      %c0_22 = arith.constant 0 : index
      %17 = vector.load %arg5[%c0_20, %c0_21, %c0_22] : memref<2x8x128xf32, #tpu.memory_space<vmem>>, vector<2x8x128xf32>
      tpu.vector_store %arg5[%c0_20, %c0_21, %c0_22], %16 {strides = array<i32>} : memref<2x8x128xf32, #tpu.memory_space<vmem>>, vector<2x8x128xf32>,
      %cst_23 = arith.constant 0.000000e+00 : f32
      %18 = vector.broadcast %cst_23 : f32 to vector<2x8x128xf32>
      %c0_24 = arith.constant 0 : index
      %c0_25 = arith.constant 0 : index
      %c0_26 = arith.constant 0 : index
      %19 = vector.load %arg6[%c0_24, %c0_25, %c0_26] : memref<2x8x128xf32, #tpu.memory_space<vmem>>, vector<2x8x128xf32>
      tpu.vector_store %arg6[%c0_24, %c0_25, %c0_26], %18 {strides = array<i32>} : memref<2x8x128xf32, #tpu.memory_space<vmem>>, vector<2x8x128xf32>,
    } else {
    }
    %c0 = arith.constant 0 : index
    %c0_1 = arith.constant 0 : index
    %c0_2 = arith.constant 0 : index
    %3 = vector.load %arg2[%c0, %c0_1, %c0_2] : memref<2x8x128xf32, #tpu.memory_space<vmem>>, vector<2x8x128xf32>
    %c0_3 = arith.constant 0 : index
    %c0_4 = arith.constant 0 : index
    %c0_5 = arith.constant 0 : index
    %4 = vector.load %arg3[%c0_3, %c0_4, %c0_5] : memref<2x8x128xf32, #tpu.memory_space<vmem>>, vector<2x8x128xf32>
    %5 = arith.mulf %3, %4 : vector<2x8x128xf32>
    %6 = arith.addf %3, %4 : vector<2x8x128xf32>
    %c0_6 = arith.constant 0 : index
    %c0_7 = arith.constant 0 : index
    %c0_8 = arith.constant 0 : index
    %7 = vector.load %arg5[%c0_6, %c0_7, %c0_8] : memref<2x8x128xf32, #tpu.memory_space<vmem>>, vector<2x8x128xf32>
    %8 = arith.addf %7, %5 : vector<2x8x128xf32>
    %c0_9 = arith.constant 0 : index
    %c0_10 = arith.constant 0 : index
    %c0_11 = arith.constant 0 : index
    %9 = vector.load %arg5[%c0_9, %c0_10, %c0_11] : memref<2x8x128xf32, #tpu.memory_space<vmem>>, vector<2x8x128xf32>
    tpu.vector_store %arg5[%c0_9, %c0_10, %c0_11], %8 {strides = array<i32>} : memref<2x8x128xf32, #tpu.memory_space<vmem>>, vector<2x8x128xf32>,
    %c0_12 = arith.constant 0 : index
    %c0_13 = arith.constant 0 : index
    %c0_14 = arith.constant 0 : index
    %10 = vector.load %arg6[%c0_12, %c0_13, %c0_14] : memref<2x8x128xf32, #tpu.memory_space<vmem>>, vector<2x8x128xf32>
    %11 = arith.addf %10, %6 : vector<2x8x128xf32>
    %c0_15 = arith.constant 0 : index
    %c0_16 = arith.constant 0 : index
    %c0_17 = arith.constant 0 : index
    %12 = vector.load %arg6[%c0_15, %c0_16, %c0_17] : memref<2x8x128xf32, #tpu.memory_space<vmem>>, vector<2x8x128xf32>
    tpu.vector_store %arg6[%c0_15, %c0_16, %c0_17], %11 {strides = array<i32>} : memref<2x8x128xf32, #tpu.memory_space<vmem>>, vector<2x8x128xf32>,
    %c0_i32_18 = arith.constant 0 : i32
    %13 = arith.cmpi eq, %arg1, %c0_i32_18 : i32
    %14 = arith.extui %13 : i1 to i32
    %c0_i32_19 = arith.constant 0 : i32
    %15 = arith.cmpi ne, %14, %c0_i32_19 : i32
    scf.if %15 {
      %c0_20 = arith.constant 0 : index
      %c0_21 = arith.constant 0 : index
      %c0_22 = arith.constant 0 : index
      %16 = vector.load %arg5[%c0_20, %c0_21, %c0_22] : memref<2x8x128xf32, #tpu.memory_space<vmem>>, vector<2x8x128xf32>
      %cst = arith.constant dense<0.000000e+00> : vector<2x128xf32>
      %17 = vector.multi_reduction <add>, %16, %cst [1] : vector<2x8x128xf32> to vector<2x128xf32>
      %18 = vector.shape_cast %17 : vector<2x128xf32> to vector<2x1x128xf32>
      %cst_23 = arith.constant dense<0.000000e+00> : vector<2x1xf32>
      %19 = vector.multi_reduction <add>, %18, %cst_23 [2] : vector<2x1x128xf32> to vector<2x1xf32>
      %20 = vector.shape_cast %19 : vector<2x1xf32> to vector<2x1x1xf32>
      %c0_24 = arith.constant 0 : index
      %c0_25 = arith.constant 0 : index
      %c0_26 = arith.constant 0 : index
      %21 = vector.load %arg6[%c0_24, %c0_25, %c0_26] : memref<2x8x128xf32, #tpu.memory_space<vmem>>, vector<2x8x128xf32>
      %cst_27 = arith.constant dense<0.000000e+00> : vector<2x128xf32>
      %22 = vector.multi_reduction <add>, %21, %cst_27 [1] : vector<2x8x128xf32> to vector<2x128xf32>
      %23 = vector.shape_cast %22 : vector<2x128xf32> to vector<2x1x128xf32>
      %cst_28 = arith.constant dense<0.000000e+00> : vector<2x1xf32>
      %24 = vector.multi_reduction <add>, %23, %cst_28 [2] : vector<2x1x128xf32> to vector<2x1xf32>
      %25 = vector.shape_cast %24 : vector<2x1xf32> to vector<2x1x1xf32>
      %cst_29 = arith.constant 1.000000e+00 : f32
      %26 = vector.broadcast %cst_29 : f32 to vector<2x1x1xf32>
      %27 = arith.addf %20, %26 : vector<2x1x1xf32>
      %cst_30 = arith.constant 2.000000e+00 : f32
      %28 = vector.broadcast %cst_30 : f32 to vector<2x1x1xf32>
      %29 = arith.mulf %28, %27 : vector<2x1x1xf32>
      %cst_31 = arith.constant 1.000000e+00 : f32
      %30 = vector.broadcast %cst_31 : f32 to vector<2x1x1xf32>
      %31 = arith.addf %25, %30 : vector<2x1x1xf32>
      %32 = arith.divf %29, %31 : vector<2x1x1xf32>
      %33 = vector.shape_cast %32 : vector<2x1x1xf32> to vector<2x1x1xf32>
      %34 = vector.broadcast %33 : vector<2x1x1xf32> to vector<2x1x128xf32>
      %c0_32 = arith.constant 0 : index
      %c0_33 = arith.constant 0 : index
      %c0_34 = arith.constant 0 : index
      %35 = vector.load %arg4[%c0_32, %c0_33, %c0_34] : memref<2x1x128xf32, #tpu.memory_space<vmem>>, vector<2x1x128xf32>
      tpu.vector_store %arg4[%c0_32, %c0_33, %c0_34], %34 {strides = array<i32>} : memref<2x1x128xf32, #tpu.memory_space<vmem>>, vector<2x1x128xf32>,
    } else {
    }
    return
  }
  func.func @transform_0(%arg0: i32, %arg1: i32) -> (i32, i32, i32) {
    %c0_i32 = arith.constant 0 : i32
    %c0_i32_0 = arith.constant 0 : i32
    return %arg0, %arg1, %c0_i32 : i32, i32, i32
  }
  func.func @transform_1(%arg0: i32, %arg1: i32) -> (i32, i32, i32) {
    %c0_i32 = arith.constant 0 : i32
    %c0_i32_0 = arith.constant 0 : i32
    return %arg0, %arg1, %c0_i32 : i32, i32, i32
  }
  func.func @transform_2(%arg0: i32, %arg1: i32) -> (i32, i32, i32) {
    %c0_i32 = arith.constant 0 : i32
    %c0_i32_0 = arith.constant 0 : i32
    %c0_i32_1 = arith.constant 0 : i32
    return %arg0, %c0_i32, %c0_i32_0 : i32, i32, i32
  }
}

</mosaic_0001>

<llo_original>
// kernel: tpu_custom_call.1
$region0: #{tpu_custom_call.1}
  #allocation0 [shape = 'u32[]', space=smem, size = 0x4, offset = 0x4, fixed_abs, tag = 'smem constant byte address 0x4 - core index']
  #allocation1 [shape = 'u32[144,128]{1,0:T(1,128)}', space=vmem, size = 0x12000, scoped, tag = 'internal scratch']
  #allocation2 [shape = 'f32[2,8,128]{2,1,0:T(8,128)}', space=vmem, size = 0x2000, scoped, tag = 'scratch operand']
  #allocation3 [shape = 'f32[2,8,128]{2,1,0:T(8,128)}', space=vmem, size = 0x2000, scoped, tag = 'scratch operand']
  %s0 = inlined_call_operand.hbm [shape: f32[2,8,128], index: 0, kind: input, shape index: {}]
  %s1 = inlined_call_operand.hbm [shape: f32[2,8,128], index: 1, kind: input, shape index: {}]
  %s2 = inlined_call_operand.hbm [shape: f32[2,1,128], index: 2, kind: output, shape index: {}]
  %s3 = sld [smem:[#allocation0]]
  $region34: #{tpu_custom_call.1} parent=0
    _
  %s5 = ssub.s32 1, %s3
  %s6 = scalar_select 0, %s5, %s3
  $region1: #{tpu_custom_call.1} parent=0
    #allocation4 [shape = 'u8[8192]{0}', space=vmem, size = 0x2000, scoped, tag = 'input window, operand 0, single buffered']
    #allocation5 [shape = 's32[1]{0}', space=sflag, size = 0x4, scoped, tag = 'scoped memory for tpu_custom_call.1']
    #allocation6 [shape = 's32[1]{0}', space=sflag, size = 0x4, scoped, tag = 'scoped memory for tpu_custom_call.1']
    #allocation7 [shape = 'u8[8192]{0}', space=vmem, size = 0x2000, scoped, tag = 'input window, operand 1, single buffered']
    #allocation8 [shape = 's32[1]{0}', space=sflag, size = 0x4, scoped, tag = 'scoped memory for tpu_custom_call.1']
    #allocation9 [shape = 'u8[1024]{0}', space=vmem, size = 0x400, scoped, tag = 'output window, operand 0, single buffered']
    %7 = vsyncpa [#allocation5], 0
    %8 = vsyncpa [#allocation8], 0
    %9 = vsyncpa [#allocation6], 0
    // Predicated region
    $region2: #{tpu_custom_call.1} parent=1 // pred_check
      _
    $region3: #{tpu_custom_call.1} parent=1 // pred_check_branch
      %11 = sbr.rel (0) target = $region5
    $region4: #{tpu_custom_call.1} parent=1 // pred_region
      %s13 = ssub.s32 256, 256
      %14 = vsyncadd [#allocation5], %s13
      %s15 = sshll.u32 [#allocation4], 4
      %s16 = int_to_ptr.vmem [resolvable:$true] %s15
      %21 = dma.hbm_to_vmem [thread:$0]  %s0, 256, %s16, [#allocation5], 128, 128, 8
    $region5: #{tpu_custom_call.1} parent=1 // pred_fallthru
      _
    // Predicated region
    $region6: #{tpu_custom_call.1} parent=1 // pred_check
      _
    $region7: #{tpu_custom_call.1} parent=1 // pred_check_branch
      %23 = sbr.rel (0) target = $region9
    $region8: #{tpu_custom_call.1} parent=1 // pred_region
      %s25 = ssub.s32 256, 256
      %26 = vsyncadd [#allocation8], %s25
      %s27 = sshll.u32 [#allocation7], 4
      %s28 = int_to_ptr.vmem [resolvable:$true] %s27
      %33 = dma.hbm_to_vmem [thread:$0]  %s1, 256, %s28, [#allocation8], 128, 128, 8
    $region9: #{tpu_custom_call.1} parent=1 // pred_fallthru
      _
    // Predicated region
    $region10: #{tpu_custom_call.1} parent=1 // pred_check
      _
    $region11: #{tpu_custom_call.1} parent=1 // pred_check_branch
      %35 = sbr.rel (0) target = $region13
    $region12: #{tpu_custom_call.1} parent=1 // pred_region
      %36 = dma.done [#allocation5], 256
    $region13: #{tpu_custom_call.1} parent=1 // pred_fallthru
      _
    // Predicated region
    $region14: #{tpu_custom_call.1} parent=1 // pred_check
      _
    $region15: #{tpu_custom_call.1} parent=1 // pred_check_branch
      %38 = sbr.rel (0) target = $region17
    $region16: #{tpu_custom_call.1} parent=1 // pred_region
      %39 = dma.done [#allocation8], 256
    $region17: #{tpu_custom_call.1} parent=1 // pred_fallthru
      _
    %p40 = scmp.eq.s32.totalorder 0, 0
    // Predicated region
    $region18: #{tpu_custom_call.1} parent=1 // pred_check
      %p41 = pneg %p40
    $region19: #{tpu_custom_call.1} parent=1 // pred_check_branch
      %43 = sbr.rel (%p41) target = $region21
    $region20: #{tpu_custom_call.1} parent=1 // pred_region
      %44 = vst [vmem:[#allocation2] sm:$0xff] 0.0
      %45 = vst [vmem:[#allocation2 + $0x8] sm:$0xff] 0.0
      %46 = vst [vmem:[#allocation3] sm:$0xff] 0.0
      %47 = vst [vmem:[#allocation3 + $0x8] sm:$0xff] 0.0
    $region21: #{tpu_custom_call.1} parent=1 // pred_fallthru
      _
    %v48 = vld [vmem:[#allocation4] sm:$0xff]
    %v49 = vld [vmem:[#allocation4 + $0x8] sm:$0xff]
    %v50 = vld [vmem:[#allocation7] sm:$0xff]
    %v51 = vld [vmem:[#allocation7 + $0x8] sm:$0xff]
    %v52 = vmul.f32 %v48, %v50
    %v53 = vmul.f32 %v49, %v51
    %v54 = vadd.f32 %v48, %v50
    %v55 = vadd.f32 %v49, %v51
    %v56 = vld [vmem:[#allocation2] sm:$0xff]
    %v57 = vld [vmem:[#allocation2 + $0x8] sm:$0xff]
    %v58 = vadd.f32 %v56, %v52
    %v59 = vadd.f32 %v57, %v53
    %60 = vst [vmem:[#allocation2] sm:$0xff] %v58
    %61 = vst [vmem:[#allocation2 + $0x8] sm:$0xff] %v59
    %v62 = vld [vmem:[#allocation3] sm:$0xff]
    %v63 = vld [vmem:[#allocation3 + $0x8] sm:$0xff]
    %v64 = vadd.f32 %v62, %v54
    %v65 = vadd.f32 %v63, %v55
    %66 = vst [vmem:[#allocation3] sm:$0xff] %v64
    %67 = vst [vmem:[#allocation3 + $0x8] sm:$0xff] %v65
    // Predicated region
    $region22: #{tpu_custom_call.1} parent=1 // pred_check
      %p68 = pneg %p40
    $region23: #{tpu_custom_call.1} parent=1 // pred_check_branch
      %70 = sbr.rel (%p68) target = $region25
    $region24: #{tpu_custom_call.1} parent=1 // pred_region
      %v71 = vld [vmem:[#allocation2] sm:$0xff]
      %v72 = vld [vmem:[#allocation2 + $0x8] sm:$0xff]
      %v73 = vrot.slane %v71, 4
      %v74 = vadd.f32 %v71, %v73
      %v75 = vrot.slane %v74, 2
      %v76 = vadd.f32 %v74, %v75
      %v77 = vrot.slane %v76, 1
      %v78 = vadd.f32 %v76, %v77
      %v79 = vrot.slane %v72, 4
      %v80 = vadd.f32 %v72, %v79
      %v81 = vrot.slane %v80, 2
      %v82 = vadd.f32 %v80, %v81
      %v83 = vrot.slane %v82, 1
      %v84 = vadd.f32 %v82, %v83
      %85 = vadd.xlane.f32.xlu0 %v78
      %v86 = vpop.xlane.xlu0 %85
      %87 = vadd.xlane.f32.xlu0 %v84
      %v88 = vpop.xlane.xlu0 %87
      %v89 = vld [vmem:[#allocation3] sm:$0xff]
      %v90 = vld [vmem:[#allocation3 + $0x8] sm:$0xff]
      %v91 = vrot.slane %v89, 4
      %v92 = vadd.f32 %v89, %v91
      %v93 = vrot.slane %v92, 2
      %v94 = vadd.f32 %v92, %v93
      %v95 = vrot.slane %v94, 1
      %v96 = vadd.f32 %v94, %v95
      %v97 = vrot.slane %v90, 4
      %v98 = vadd.f32 %v90, %v97
      %v99 = vrot.slane %v98, 2
      %v100 = vadd.f32 %v98, %v99
      %v101 = vrot.slane %v100, 1
      %v102 = vadd.f32 %v100, %v101
      %103 = vadd.xlane.f32.xlu0 %v96
      %v104 = vpop.xlane.xlu0 %103
      %105 = vadd.xlane.f32.xlu0 %v102
      %v106 = vpop.xlane.xlu0 %105
      %v107 = vadd.f32 %v86, 1.0
      %v108 = vadd.f32 %v88, 1.0
      %v109 = vmul.f32 %v107, 2.0
      %v110 = vmul.f32 %v108, 2.0
      %v111 = vadd.f32 %v104, 1.0
      %v112 = vadd.f32 %v106, 1.0
      %v113 = vrcp.pop %v111
      %v114 = vmul.f32 %v109, %v113
      %v115 = vrcp.pop %v112
      %v116 = vmul.f32 %v110, %v115
      %117 = vst [vmem:[#allocation9] sm:$0x1] %v114
      %118 = vst [vmem:[#allocation9 + $0x1] sm:$0x1] %v116
    $region25: #{tpu_custom_call.1} parent=1 // pred_fallthru
      _
    // Predicated region
    $region26: #{tpu_custom_call.1} parent=1 // pred_check
      _
    $region27: #{tpu_custom_call.1} parent=1 // pred_check_branch
      %120 = sbr.rel (0) target = $region29
    $region28: #{tpu_custom_call.1} parent=1 // pred_region
      %s122 = ssub.s32 32, 32
      %123 = vsyncadd [#allocation6], %s122
      %s124 = sshll.u32 [#allocation9], 4
      %s125 = int_to_ptr.vmem [resolvable:$true] %s124
      %130 = dma.vmem_to_hbm [thread:$0]  %s125, 32, %s2, [#allocation6], 16, 16, 1
    $region29: #{tpu_custom_call.1} parent=1 // pred_fallthru
      _
    // Predicated region
    $region30: #{tpu_custom_call.1} parent=1 // pred_check
      _
    $region31: #{tpu_custom_call.1} parent=1 // pred_check_branch
      %132 = sbr.rel (0) target = $region33
    $region32: #{tpu_custom_call.1} parent=1 // pred_region
      %133 = dma.done [#allocation6], 32
    $region33: #{tpu_custom_call.1} parent=1 // pred_fallthru
      _
    %134 = vsyncpa [#allocation5], 1
    %135 = vsyncpa [#allocation8], 1
    %136 = vsyncpa [#allocation6], 1

</llo_original>
